<compile_context>
chip_gen: v6e
topology: v6e:2x2x1
jax: 0.10.0
libtpu: 0.0.40
codegen_flags: <defaults>
</compile_context>

<pallas_src>
import functools

import jax
import jax.numpy as jnp
from jax import lax
from jax.experimental import pallas as pl
from jax.experimental.pallas import tpu as pltpu


def _graph_mha_kernel(adj_ref, x_ref, head_mask_ref,
                      wq_ref, bq_ref, wk_ref, bk_ref, wv_ref, bv_ref,
                      wo_ref, bo_ref, out_ref,
                      *, num_heads, head_dim, n_nodes):
    dim = num_heads * head_dim
    hn = num_heads * n_nodes

    adj = adj_ref[...]                        # (N, N) bf16, adj[dst, src]
    x = x_ref[...]                            # (N, dim) bf16
    head_mask = head_mask_ref[...]            # (H*N, dim) bf16; row h*N+v keeps head-h lanes

    # --- Q / K / V projections: bf16 MXU matmuls, f32 accumulation.
    # TODO(synk): when dim is a multiple of 128, fuse into one x @ W_qkv (dim, 3*dim) matmul
    # and slice the result at 128-lane-aligned offsets.
    q = jnp.dot(x, wq_ref[...], preferred_element_type=jnp.float32) + bq_ref[...]   # (N, dim)
    k = jnp.dot(x, wk_ref[...], preferred_element_type=jnp.float32) + bk_ref[...]   # (N, dim)
    v = jnp.dot(x, wv_ref[...], preferred_element_type=jnp.float32) + bv_ref[...]   # (N, dim)

    # --- All-head logits in ONE MXU launch (contraction depth = dim):
    #       s[h*N + v, u] = sum_{d in head h} k[v, d] * q[u, d]   ==  u_dot_v for edge u->v
    # Head replication happens inside the multiply with the precomputed mask (no concatenate,
    # no sublane copies).
    k_stk = (head_mask.reshape(num_heads, n_nodes, dim)
             * k.astype(jnp.bfloat16)[None]).reshape(hn, dim)                        # (H*N, dim) bf16
    # q is the small operand of the ((1,),(1,)) contraction, so any transpose the MXU needs
    # lands on q, not on the H-stacked K.
    s = lax.dot_general(k_stk, q.astype(jnp.bfloat16), (((1,), (1,)), ((), ())),
                        preferred_element_type=jnp.float32)                          # (H*N, N)
    s = s * (1.0 / float(head_dim) ** 0.5)
    # TODO(synk): once dim exceeds the MXU depth quantum (128 on v5e, 256 on v6e/v7x) the
    # zeroed (H-1)/H of this contraction costs real MXU passes -- switch to head-batched logits.

    # --- edge_softmax over the incoming edges (source axis) of each destination, per head.
    # One (N, N) adjacency tile broadcast over the head axis (no H materialized copies of adj).
    adj_f = adj.astype(jnp.float32)[None]                                            # (1, N, N)
    s3 = s.reshape(num_heads, n_nodes, n_nodes)
    logits = jnp.where(adj_f > 0.0, s3, jnp.float32(-1e30))
    m = jnp.max(logits, axis=-1, keepdims=True)
    p3 = jnp.exp(logits - m) * adj_f
    denom = jnp.sum(p3, axis=-1, keepdims=True)
    p3 = p3 * pl.reciprocal(jnp.where(denom > 0.0, denom, 1.0), approx=True)
    # zero-in-degree destinations: adj row all zero -> p row all zero -> attention output 0.
    p = p3.reshape(hn, n_nodes)                                                      # (H*N, N)

    # --- u_mul_e_sum for all heads in ONE bf16 matmul (f32 accumulation), then fold heads.
    o_all = jnp.dot(p.astype(jnp.bfloat16), v.astype(jnp.bfloat16),
                    preferred_element_type=jnp.float32) * head_mask                  # (H*N, dim)
    o = o_all[0:n_nodes]
    for h in range(1, num_heads):                                                    # static unroll
        o = o + o_all[h * n_nodes:(h + 1) * n_nodes]                                 # (N, dim)

    # --- output projection. Dropout is the identity at inference.
    # TODO(synk): training-mode dropout would use pltpu.prng_seed / pltpu.prng_random_bits.
    out = jnp.dot(o.astype(jnp.bfloat16), wo_ref[...],
                  preferred_element_type=jnp.float32) + bo_ref[...]
    out_ref[...] = out
    # TODO(synk): at dim < 128 this is a masked partial store; for production sizes pad dim
    # (or emit bf16) so the output block is lane-dense.


def prepare_attention_params(params, *, dim, num_heads, n_nodes):
    """One-time preprocessing (kept OUT of the per-forward path): transpose + bf16-cast the
    weights, reshape the biases, and build the head-selection mask."""
    head_dim = dim // num_heads
    wq, bq, wk, bk, wv, bv, wo, bo = params

    def prep_w(w):
        return w.T.astype(jnp.bfloat16)       # kernel computes row-major x @ W^T

    def prep_b(b):
        return b.reshape(1, dim).astype(jnp.float32)

    rows = jnp.arange(num_heads * n_nodes)[:, None]
    cols = jnp.arange(dim)[None, :]
    head_mask = ((cols // head_dim) == (rows // n_nodes)).astype(jnp.bfloat16)       # (H*N, dim)

    return (head_mask,
            prep_w(wq), prep_b(bq), prep_w(wk), prep_b(bk),
            prep_w(wv), prep_b(bv), prep_w(wo), prep_b(bo))


def transformer_attention(adj, x, prepared, *, dim, num_heads):
    """Batched forward equivalent to TransformerAttentionModule.forward (inference).

    adj: (B, N, N) adjacency mask, adj[b, dst, src] != 0 iff edge src->dst.
    x:   (B, N, dim) node features.
    prepared: output of prepare_attention_params().
    """
    if dim % num_heads != 0:
        raise ValueError('Dimension mismatch: hidden_dim should be a multiple of num_heads.')
    head_dim = dim // num_heads
    batch, n_nodes, _ = x.shape
    hn = num_heads * n_nodes

    head_mask = prepared[0]
    weights = prepared[1:]

    kernel = functools.partial(_graph_mha_kernel, num_heads=num_heads,
                               head_dim=head_dim, n_nodes=n_nodes)

    const = lambda b: (0, 0)                  # weights / biases / mask: same block every step
    w_spec = pl.BlockSpec((dim, dim), const)  # -> fetched once, VMEM-resident across the grid
    b_spec = pl.BlockSpec((1, dim), const)

    grid_spec = pltpu.PrefetchScalarGridSpec(
        num_scalar_prefetch=0,
        grid=(batch,),
        in_specs=[
            pl.BlockSpec((None, n_nodes, n_nodes), lambda b: (b, 0, 0)),   # adj (per graph)
            pl.BlockSpec((None, n_nodes, dim), lambda b: (b, 0, 0)),       # x   (per graph)
            pl.BlockSpec((hn, dim), const),                                # head mask
            w_spec, b_spec, w_spec, b_spec, w_spec, b_spec, w_spec, b_spec,
        ],
        out_specs=pl.BlockSpec((None, n_nodes, dim), lambda b: (b, 0, 0)),
    )
    # TODO(synk): for large N, add a dst-tile grid axis over adj/q/out ("parallel") and a
    # src-tile axis ("arbitrary") with an f32 accumulator + pl.when init/finalize; size the
    # tiles per generation (128/256-aligned against 128 MiB VMEM on v5e/v6e; roughly half-sized
    # tiles and <=~48 MiB on v7x since the H-stacked f32 logits tile busts 64 MiB VMEM first).
    return pl.pallas_call(
        kernel,
        out_shape=jax.ShapeDtypeStruct((batch, n_nodes, dim), jnp.float32),
        grid_spec=grid_spec,
        compiler_params=pltpu.CompilerParams(
            dimension_semantics=("parallel",),      # v7x: batch axis splits across both TCs
            vmem_limit_bytes=32 * 1024 * 1024),
    )(adj.astype(jnp.bfloat16), x.astype(jnp.bfloat16), head_mask, *weights)


def init_params(key, dim):
    """nn.Linear default init: U(-1/sqrt(fan_in), 1/sqrt(fan_in)) for weight and bias."""
    ks = jax.random.split(key, 8)
    bound = 1.0 / float(jnp.sqrt(jnp.float32(dim)))

    def lin(kw, kb):
        w = jax.random.uniform(kw, (dim, dim), jnp.float32, -bound, bound)
        b = jax.random.uniform(kb, (dim,), jnp.float32, -bound, bound)
        return w, b

    wq, bq = lin(ks[0], ks[1])
    wk, bk = lin(ks[2], ks[3])
    wv, bv = lin(ks[4], ks[5])
    wo, bo = lin(ks[6], ks[7])
    return wq, bq, wk, bk, wv, bv, wo, bo


def reference(adj, x, params, *, dim, num_heads):
    """Pure-JAX f32 batched reference with the module's semantics (for sanity check)."""
    head_dim = dim // num_heads
    wq, bq, wk, bk, wv, bv, wo, bo = params
    batch, n, _ = x.shape
    q = (x @ wq.T + bq).reshape(batch, n, num_heads, head_dim)
    k = (x @ wk.T + bk).reshape(batch, n, num_heads, head_dim)
    v = (x @ wv.T + bv).reshape(batch, n, num_heads, head_dim)
    # u_dot_v: edge (u -> v) has score[h] = <q[u,h], k[v,h]>; adj[b, v, u] marks that edge.
    s = jnp.einsum('buhd,bvhd->bhvu', q, k) / head_dim ** 0.5          # (B, H, dst, src)
    mask = (adj > 0.0)[:, None, :, :]
    logits = jnp.where(mask, s, -jnp.inf)
    m = jnp.max(logits, axis=-1, keepdims=True)
    m = jnp.where(jnp.isfinite(m), m, 0.0)
    p = jnp.exp(logits - m) * mask.astype(jnp.float32)
    denom = jnp.sum(p, axis=-1, keepdims=True)
    p = p / jnp.where(denom > 0.0, denom, 1.0)
    o = jnp.einsum('bhvu,buhd->bvhd', p, v).reshape(batch, n, dim)
    return o @ wo.T + bo


if __name__ == "__main__":
    dim = 32
    num_heads = 4
    n_nodes = 16
    batch = 8            # batch of graphs pipelined over the grid ("parallel" axis)
    dropout = 0.1        # identity at inference

    key = jax.random.PRNGKey(0)
    k_x, k_adj, k_params = jax.random.split(key, 3)

    x = jax.random.normal(k_x, (batch, n_nodes, dim), jnp.float32)
    # Dense directed adjacency masks: adj[b, dst, src] = 1.0 for edge src -> dst (plus
    # self-loops, the usual graph-transformer preprocessing).
    adj = (jax.random.uniform(k_adj, (batch, n_nodes, n_nodes)) < 0.25).astype(jnp.float32)
    adj = jnp.maximum(adj, jnp.eye(n_nodes, dtype=jnp.float32)[None])

    params = init_params(k_params, dim)

    # Quantize x and the weight matrices through bf16 up-front so the f32 reference consumes
    # the same operand values as the bf16 MXU path; remaining differences are internal rounding.
    x_q = x.astype(jnp.bfloat16).astype(jnp.float32)
    params_q = tuple(p.astype(jnp.bfloat16).astype(jnp.float32) if p.ndim == 2 else p
                     for p in params)

    # One-time preprocessing and activation/adjacency casts (kept out of the per-forward path).
    prepared = prepare_attention_params(params_q, dim=dim, num_heads=num_heads, n_nodes=n_nodes)
    adj_bf = adj.astype(jnp.bfloat16)
    x_bf = x_q.astype(jnp.bfloat16)

    out = transformer_attention(adj_bf, x_bf, prepared, dim=dim, num_heads=num_heads)
    out = jax.block_until_ready(out)

    ref = reference(adj, x_q, params_q, dim=dim, num_heads=num_heads)
    assert out.shape == (batch, n_nodes, dim)
    max_err = float(jnp.max(jnp.abs(out - ref)))
    assert jnp.allclose(out, ref, atol=3e-2, rtol=3e-2), max_err

    print("KERNEL_OK")
</pallas_src>

<mosaic_0001>
module attributes {stable_mosaic.version = 11 : i64} {
  func.func @_graph_mha_kernel(%arg0: i32, %arg1: memref<1x16x16xbf16, #tpu.memory_space<vmem>>, %arg2: memref<1x16x32xbf16, #tpu.memory_space<vmem>>, %arg3: memref<64x32xbf16, #tpu.memory_space<vmem>>, %arg4: memref<32x32xbf16, #tpu.memory_space<vmem>>, %arg5: memref<1x32xf32, #tpu.memory_space<vmem>>, %arg6: memref<32x32xbf16, #tpu.memory_space<vmem>>, %arg7: memref<1x32xf32, #tpu.memory_space<vmem>>, %arg8: memref<32x32xbf16, #tpu.memory_space<vmem>>, %arg9: memref<1x32xf32, #tpu.memory_space<vmem>>, %arg10: memref<32x32xbf16, #tpu.memory_space<vmem>>, %arg11: memref<1x32xf32, #tpu.memory_space<vmem>>, %arg12: memref<1x16x32xf32, #tpu.memory_space<vmem>>) attributes {dimension_semantics = [#tpu.dimension_semantics<parallel>], iteration_bounds = array<i64: 8>, scalar_prefetch = 0 : i64, scratch_operands = 0 : i64, tpu.core_type = #tpu.core_type<tc>, window_params = [{transform_indices = @transform_0, window_bounds = array<i64: 1, 16, 16>}, {transform_indices = @transform_1, window_bounds = array<i64: 1, 16, 32>}, {pipeline_mode = #tpu.pipeline_mode<synchronous>, transform_indices = @transform_2, window_bounds = array<i64: 64, 32>}, {pipeline_mode = #tpu.pipeline_mode<synchronous>, transform_indices = @transform_3, window_bounds = array<i64: 32, 32>}, {pipeline_mode = #tpu.pipeline_mode<synchronous>, transform_indices = @transform_4, window_bounds = array<i64: 1, 32>}, {pipeline_mode = #tpu.pipeline_mode<synchronous>, transform_indices = @transform_5, window_bounds = array<i64: 32, 32>}, {pipeline_mode = #tpu.pipeline_mode<synchronous>, transform_indices = @transform_6, window_bounds = array<i64: 1, 32>}, {pipeline_mode = #tpu.pipeline_mode<synchronous>, transform_indices = @transform_7, window_bounds = array<i64: 32, 32>}, {pipeline_mode = #tpu.pipeline_mode<synchronous>, transform_indices = @transform_8, window_bounds = array<i64: 1, 32>}, {pipeline_mode = #tpu.pipeline_mode<synchronous>, transform_indices = @transform_9, window_bounds = array<i64: 32, 32>}, {pipeline_mode = #tpu.pipeline_mode<synchronous>, transform_indices = @transform_10, window_bounds = array<i64: 1, 32>}, {transform_indices = @transform_11, window_bounds = array<i64: 1, 16, 32>}]} {
    %c0 = arith.constant 0 : index
    %c0_0 = arith.constant 0 : index
    %c0_1 = arith.constant 0 : index
    %0 = vector.load %arg1[%c0, %c0_0, %c0_1] : memref<1x16x16xbf16, #tpu.memory_space<vmem>>, vector<1x16x16xbf16>
    %1 = vector.shape_cast %0 : vector<1x16x16xbf16> to vector<16x16xbf16>
    %c0_2 = arith.constant 0 : index
    %c0_3 = arith.constant 0 : index
    %c0_4 = arith.constant 0 : index
    %2 = vector.load %arg2[%c0_2, %c0_3, %c0_4] : memref<1x16x32xbf16, #tpu.memory_space<vmem>>, vector<1x16x32xbf16>
    %3 = vector.shape_cast %2 : vector<1x16x32xbf16> to vector<16x32xbf16>
    %c0_5 = arith.constant 0 : index
    %c0_6 = arith.constant 0 : index
    %4 = vector.load %arg3[%c0_5, %c0_6] : memref<64x32xbf16, #tpu.memory_space<vmem>>, vector<64x32xbf16>
    %c0_7 = arith.constant 0 : index
    %c0_8 = arith.constant 0 : index
    %5 = vector.load %arg4[%c0_7, %c0_8] : memref<32x32xbf16, #tpu.memory_space<vmem>>, vector<32x32xbf16>
    %cst = arith.constant dense<0.000000e+00> : vector<16x32xf32>
    %6 = tpu.matmul %3, %5, %cst {dimension_numbers = #tpu.dot_dimension_numbers<[1], [0], [0], [1], [0, 0, 1, 1], [], []>} : vector<16x32xbf16>, vector<32x32xbf16>, vector<16x32xf32> -> vector<16x32xf32>
    %c0_9 = arith.constant 0 : index
    %c0_10 = arith.constant 0 : index
    %7 = vector.load %arg5[%c0_9, %c0_10] : memref<1x32xf32, #tpu.memory_space<vmem>>, vector<1x32xf32>
    %8 = vector.broadcast %7 : vector<1x32xf32> to vector<16x32xf32>
    %9 = arith.addf %6, %8 : vector<16x32xf32>
    %c0_11 = arith.constant 0 : index
    %c0_12 = arith.constant 0 : index
    %10 = vector.load %arg6[%c0_11, %c0_12] : memref<32x32xbf16, #tpu.memory_space<vmem>>, vector<32x32xbf16>
    %cst_13 = arith.constant dense<0.000000e+00> : vector<16x32xf32>
    %11 = tpu.matmul %3, %10, %cst_13 {dimension_numbers = #tpu.dot_dimension_numbers<[1], [0], [0], [1], [0, 0, 1, 1], [], []>} : vector<16x32xbf16>, vector<32x32xbf16>, vector<16x32xf32> -> vector<16x32xf32>
    %c0_14 = arith.constant 0 : index
    %c0_15 = arith.constant 0 : index
    %12 = vector.load %arg7[%c0_14, %c0_15] : memref<1x32xf32, #tpu.memory_space<vmem>>, vector<1x32xf32>
    %13 = vector.broadcast %12 : vector<1x32xf32> to vector<16x32xf32>
    %14 = arith.addf %11, %13 : vector<16x32xf32>
    %c0_16 = arith.constant 0 : index
    %c0_17 = arith.constant 0 : index
    %15 = vector.load %arg8[%c0_16, %c0_17] : memref<32x32xbf16, #tpu.memory_space<vmem>>, vector<32x32xbf16>
    %cst_18 = arith.constant dense<0.000000e+00> : vector<16x32xf32>
    %16 = tpu.matmul %3, %15, %cst_18 {dimension_numbers = #tpu.dot_dimension_numbers<[1], [0], [0], [1], [0, 0, 1, 1], [], []>} : vector<16x32xbf16>, vector<32x32xbf16>, vector<16x32xf32> -> vector<16x32xf32>
    %c0_19 = arith.constant 0 : index
    %c0_20 = arith.constant 0 : index
    %17 = vector.load %arg9[%c0_19, %c0_20] : memref<1x32xf32, #tpu.memory_space<vmem>>, vector<1x32xf32>
    %18 = vector.broadcast %17 : vector<1x32xf32> to vector<16x32xf32>
    %19 = arith.addf %16, %18 : vector<16x32xf32>
    %20 = vector.shape_cast %4 : vector<64x32xbf16> to vector<4x16x32xbf16>
    %21 = arith.truncf %14 : vector<16x32xf32> to vector<16x32xbf16>
    %22 = vector.shape_cast %21 : vector<16x32xbf16> to vector<1x16x32xbf16>
    %23 = vector.broadcast %22 : vector<1x16x32xbf16> to vector<4x16x32xbf16>
    %24 = arith.mulf %20, %23 : vector<4x16x32xbf16>
    %25 = vector.shape_cast %24 : vector<4x16x32xbf16> to vector<64x32xbf16>
    %26 = arith.truncf %9 : vector<16x32xf32> to vector<16x32xbf16>
    %cst_21 = arith.constant dense<0.000000e+00> : vector<64x16xf32>
    %27 = tpu.matmul %25, %26, %cst_21 {dimension_numbers = #tpu.dot_dimension_numbers<[1], [1], [0], [0], [0, 0, 1, 0], [], []>} : vector<64x32xbf16>, vector<16x32xbf16>, vector<64x16xf32> -> vector<64x16xf32>
    %cst_22 = arith.constant 0.353553385 : f32
    %28 = vector.broadcast %cst_22 : f32 to vector<64x16xf32>
    %29 = arith.mulf %27, %28 : vector<64x16xf32>
    %30 = arith.extf %1 : vector<16x16xbf16> to vector<16x16xf32>
    %31 = vector.shape_cast %30 : vector<16x16xf32> to vector<1x16x16xf32>
    %32 = vector.shape_cast %29 : vector<64x16xf32> to vector<4x16x16xf32>
    %cst_23 = arith.constant 0.000000e+00 : f32
    %33 = vector.broadcast %cst_23 : f32 to vector<1x16x16xf32>
    %34 = arith.cmpf ogt, %31, %33 : vector<1x16x16xf32>
    %cst_24 = arith.constant -1.000000e+30 : f32
    %35 = vector.shape_cast %34 : vector<1x16x16xi1> to vector<1x16x16xi1>
    %36 = vector.broadcast %35 : vector<1x16x16xi1> to vector<4x16x16xi1>
    %37 = vector.broadcast %cst_24 : f32 to vector<4x16x16xf32>
    %38 = arith.select %36, %32, %37 : vector<4x16x16xi1>, vector<4x16x16xf32>
    %cst_25 = arith.constant dense<0xFF800000> : vector<4x16xf32>
    %39 = vector.multi_reduction <maximumf>, %38, %cst_25 [2] : vector<4x16x16xf32> to vector<4x16xf32>
    %40 = vector.shape_cast %39 : vector<4x16xf32> to vector<4x16x1xf32>
    %41 = vector.broadcast %40 : vector<4x16x1xf32> to vector<4x16x16xf32>
    %42 = arith.subf %38, %41 : vector<4x16x16xf32>
    %43 = math.exp %42 : vector<4x16x16xf32>
    %44 = vector.broadcast %31 : vector<1x16x16xf32> to vector<4x16x16xf32>
    %45 = arith.mulf %43, %44 : vector<4x16x16xf32>
    %cst_26 = arith.constant dense<0.000000e+00> : vector<4x16xf32>
    %46 = vector.multi_reduction <add>, %45, %cst_26 [2] : vector<4x16x16xf32> to vector<4x16xf32>
    %47 = vector.shape_cast %46 : vector<4x16xf32> to vector<4x16x1xf32>
    %cst_27 = arith.constant 0.000000e+00 : f32
    %48 = vector.broadcast %cst_27 : f32 to vector<4x16x1xf32>
    %49 = arith.cmpf ogt, %47, %48 : vector<4x16x1xf32>
    %cst_28 = arith.constant 1.000000e+00 : f32
    %50 = vector.broadcast %cst_28 : f32 to vector<4x16x1xf32>
    %51 = arith.select %49, %47, %50 : vector<4x16x1xi1>, vector<4x16x1xf32>
    %52 = tpu.reciprocal %51 {approx = true} : vector<4x16x1xf32> -> vector<4x16x1xf32>
    %53 = vector.broadcast %52 : vector<4x16x1xf32> to vector<4x16x16xf32>
    %54 = arith.mulf %45, %53 : vector<4x16x16xf32>
    %55 = vector.shape_cast %54 : vector<4x16x16xf32> to vector<64x16xf32>
    %56 = arith.truncf %55 : vector<64x16xf32> to vector<64x16xbf16>
    %57 = arith.truncf %19 : vector<16x32xf32> to vector<16x32xbf16>
    %cst_29 = arith.constant dense<0.000000e+00> : vector<64x32xf32>
    %58 = tpu.matmul %56, %57, %cst_29 {dimension_numbers = #tpu.dot_dimension_numbers<[1], [0], [0], [1], [0, 0, 1, 1], [], []>} : vector<64x16xbf16>, vector<16x32xbf16>, vector<64x32xf32> -> vector<64x32xf32>
    %59 = arith.extf %4 : vector<64x32xbf16> to vector<64x32xf32>
    %60 = arith.mulf %58, %59 : vector<64x32xf32>
    %61 = vector.extract_strided_slice %60 {offsets = [0, 0], sizes = [16, 32], strides = [1, 1]} : vector<64x32xf32> to vector<16x32xf32>
    %62 = vector.extract_strided_slice %60 {offsets = [16, 0], sizes = [16, 32], strides = [1, 1]} : vector<64x32xf32> to vector<16x32xf32>
    %63 = arith.addf %61, %62 : vector<16x32xf32>
    %64 = vector.extract_strided_slice %60 {offsets = [32, 0], sizes = [16, 32], strides = [1, 1]} : vector<64x32xf32> to vector<16x32xf32>
    %65 = arith.addf %63, %64 : vector<16x32xf32>
    %66 = vector.extract_strided_slice %60 {offsets = [48, 0], sizes = [16, 32], strides = [1, 1]} : vector<64x32xf32> to vector<16x32xf32>
    %67 = arith.addf %65, %66 : vector<16x32xf32>
    %68 = arith.truncf %67 : vector<16x32xf32> to vector<16x32xbf16>
    %c0_30 = arith.constant 0 : index
    %c0_31 = arith.constant 0 : index
    %69 = vector.load %arg10[%c0_30, %c0_31] : memref<32x32xbf16, #tpu.memory_space<vmem>>, vector<32x32xbf16>
    %cst_32 = arith.constant dense<0.000000e+00> : vector<16x32xf32>
    %70 = tpu.matmul %68, %69, %cst_32 {dimension_numbers = #tpu.dot_dimension_numbers<[1], [0], [0], [1], [0, 0, 1, 1], [], []>} : vector<16x32xbf16>, vector<32x32xbf16>, vector<16x32xf32> -> vector<16x32xf32>
    %c0_33 = arith.constant 0 : index
    %c0_34 = arith.constant 0 : index
    %71 = vector.load %arg11[%c0_33, %c0_34] : memref<1x32xf32, #tpu.memory_space<vmem>>, vector<1x32xf32>
    %72 = vector.broadcast %71 : vector<1x32xf32> to vector<16x32xf32>
    %73 = arith.addf %70, %72 : vector<16x32xf32>
    %c0_35 = arith.constant 0 : index
    %c0_36 = arith.constant 0 : index
    %c0_37 = arith.constant 0 : index
    %74 = vector.load %arg12[%c0_35, %c0_36, %c0_37] : memref<1x16x32xf32, #tpu.memory_space<vmem>>, vector<1x16x32xf32>
    %75 = vector.shape_cast %74 : vector<1x16x32xf32> to vector<16x32xf32>
    %76 = vector.shape_cast %73 : vector<16x32xf32> to vector<1x16x32xf32>
    tpu.vector_store %arg12[%c0_35, %c0_36, %c0_37], %76 {strides = array<i32>} : memref<1x16x32xf32, #tpu.memory_space<vmem>>, vector<1x16x32xf32>,
    return
  }
  func.func @transform_0(%arg0: i32) -> (i32, i32, i32) {
    %c0_i32 = arith.constant 0 : i32
    %c0_i32_0 = arith.constant 0 : i32
    %c0_i32_1 = arith.constant 0 : i32
    return %arg0, %c0_i32, %c0_i32_0 : i32, i32, i32
  }
  func.func @transform_1(%arg0: i32) -> (i32, i32, i32) {
    %c0_i32 = arith.constant 0 : i32
    %c0_i32_0 = arith.constant 0 : i32
    %c0_i32_1 = arith.constant 0 : i32
    return %arg0, %c0_i32, %c0_i32_0 : i32, i32, i32
  }
  func.func @transform_2(%arg0: i32) -> (i32, i32) {
    %c0_i32 = arith.constant 0 : i32
    %c0_i32_0 = arith.constant 0 : i32
    %c0_i32_1 = arith.constant 0 : i32
    return %c0_i32, %c0_i32_0 : i32, i32
  }
  func.func @transform_3(%arg0: i32) -> (i32, i32) {
    %c0_i32 = arith.constant 0 : i32
    %c0_i32_0 = arith.constant 0 : i32
    %c0_i32_1 = arith.constant 0 : i32
    return %c0_i32, %c0_i32_0 : i32, i32
  }
  func.func @transform_4(%arg0: i32) -> (i32, i32) {
    %c0_i32 = arith.constant 0 : i32
    %c0_i32_0 = arith.constant 0 : i32
    %c0_i32_1 = arith.constant 0 : i32
    return %c0_i32, %c0_i32_0 : i32, i32
  }
  func.func @transform_5(%arg0: i32) -> (i32, i32) {
    %c0_i32 = arith.constant 0 : i32
    %c0_i32_0 = arith.constant 0 : i32
    %c0_i32_1 = arith.constant 0 : i32
    return %c0_i32, %c0_i32_0 : i32, i32
  }
  func.func @transform_6(%arg0: i32) -> (i32, i32) {
    %c0_i32 = arith.constant 0 : i32
    %c0_i32_0 = arith.constant 0 : i32
    %c0_i32_1 = arith.constant 0 : i32
    return %c0_i32, %c0_i32_0 : i32, i32
  }
  func.func @transform_7(%arg0: i32) -> (i32, i32) {
    %c0_i32 = arith.constant 0 : i32
    %c0_i32_0 = arith.constant 0 : i32
    %c0_i32_1 = arith.constant 0 : i32
    return %c0_i32, %c0_i32_0 : i32, i32
  }
  func.func @transform_8(%arg0: i32) -> (i32, i32) {
    %c0_i32 = arith.constant 0 : i32
    %c0_i32_0 = arith.constant 0 : i32
    %c0_i32_1 = arith.constant 0 : i32
    return %c0_i32, %c0_i32_0 : i32, i32
  }
  func.func @transform_9(%arg0: i32) -> (i32, i32) {
    %c0_i32 = arith.constant 0 : i32
    %c0_i32_0 = arith.constant 0 : i32
    %c0_i32_1 = arith.constant 0 : i32
    return %c0_i32, %c0_i32_0 : i32, i32
  }
  func.func @transform_10(%arg0: i32) -> (i32, i32) {
    %c0_i32 = arith.constant 0 : i32
    %c0_i32_0 = arith.constant 0 : i32
    %c0_i32_1 = arith.constant 0 : i32
    return %c0_i32, %c0_i32_0 : i32, i32
  }
  func.func @transform_11(%arg0: i32) -> (i32, i32, i32) {
    %c0_i32 = arith.constant 0 : i32
    %c0_i32_0 = arith.constant 0 : i32
    %c0_i32_1 = arith.constant 0 : i32
    return %arg0, %c0_i32, %c0_i32_0 : i32, i32, i32
  }
}

</mosaic_0001>

<llo_original>
// kernel: tpu_custom_call.1
$region0: #{tpu_custom_call.1}
  #allocation0 [shape = 'u32[]', space=smem, size = 0x4, offset = 0x4, fixed_abs, tag = 'smem constant byte address 0x4 - core index']
  #allocation1 [shape = 'u32[144,128]{1,0:T(1,128)}', space=vmem, size = 0x12000, scoped, tag = 'internal scratch']
  %s0 = inlined_call_operand.hbm [shape: bf16[8,16,16], index: 0, kind: input, shape index: {}]
  %s1 = inlined_call_operand.hbm [shape: bf16[8,16,32], index: 1, kind: input, shape index: {}]
  %s2 = inlined_call_operand.vmem [shape: bf16[64,32], index: 2, kind: input, shape index: {}]
  %s3 = inlined_call_operand.vmem [shape: bf16[32,32], index: 3, kind: input, shape index: {}]
  %s4 = inlined_call_operand.hbm [shape: f32[1,32], index: 4, kind: input, shape index: {}]
  %s5 = inlined_call_operand.vmem [shape: bf16[32,32], index: 5, kind: input, shape index: {}]
  %s6 = inlined_call_operand.hbm [shape: f32[1,32], index: 6, kind: input, shape index: {}]
  %s7 = inlined_call_operand.vmem [shape: bf16[32,32], index: 7, kind: input, shape index: {}]
  %s8 = inlined_call_operand.hbm [shape: f32[1,32], index: 8, kind: input, shape index: {}]
  %s9 = inlined_call_operand.vmem [shape: bf16[32,32], index: 9, kind: input, shape index: {}]
  %s10 = inlined_call_operand.vmem [shape: f32[1,32], index: 10, kind: input, shape index: {}]
  %s11 = inlined_call_operand.hbm [shape: f32[8,16,32], index: 11, kind: output, shape index: {}]
  %s12 = sld [smem:[#allocation0]]
  $region97: #{tpu_custom_call.1} parent=0
    _
  %s14 = ssub.s32 1, %s12
  %s15 = scalar_select 0, %s14, %s12
  $region1: #{tpu_custom_call.1} parent=0
    #allocation2 [shape = 'u8[8192]{0}', space=vmem, size = 0x2000, scoped, tag = 'input window, operand 0']
    #allocation3 [shape = 's32[2]{0}', space=sflag, size = 0x8, scoped, tag = 'scoped memory for tpu_custom_call.1']
    #allocation4 [shape = 's32[2]{0}', space=sflag, size = 0x8, scoped, tag = 'scoped memory for tpu_custom_call.1']
    #allocation5 [shape = 'u8[8192]{0}', space=vmem, size = 0x2000, scoped, tag = 'input window, operand 1']
    #allocation6 [shape = 's32[2]{0}', space=sflag, size = 0x8, scoped, tag = 'scoped memory for tpu_custom_call.1']
    #allocation7 [shape = 'u8[512]{0}', space=vmem, size = 0x400, scoped, tag = 'input window, operand 4, single buffered']
    #allocation8 [shape = 'u8[512]{0}', space=vmem, size = 0x400, scoped, tag = 'input window, operand 6, single buffered']
    #allocation9 [shape = 's32[1]{0}', space=sflag, size = 0x4, scoped, tag = 'scoped memory for tpu_custom_call.1']
    #allocation10 [shape = 'u8[512]{0}', space=vmem, size = 0x400, scoped, tag = 'input window, operand 8, single buffered']
    #allocation11 [shape = 'u8[16384]{0}', space=vmem, size = 0x4000, scoped, tag = 'output window, operand 0']
    %16 = vsyncpa [#allocation3], 0
    %s17 = scalar_lea.sflag [#allocation3], 1
    %18 = vsyncpa %s17, 0
    %19 = vsyncpa [#allocation6], 0
    %s20 = scalar_lea.sflag [#allocation6], 1
    %21 = vsyncpa %s20, 0
    %22 = vsyncpa [#allocation9], 0
    %23 = vsyncpa [#allocation4], 0
    %s24 = scalar_lea.sflag [#allocation4], 1
    %25 = vsyncpa %s24, 0
    loop: start=0, step=1, limit=10
    $region2: #{tpu_custom_call.1} parent=1 // loop_pre_header
      _
    $region3: #{tpu_custom_call.1} parent=1 // loop_header
      %s27 = sphi 0, %s31
      %p28 = scmp.ge.s32.totalorder %s27, 10
      %s37 = sphi 0, %s39
      %s40 = sphi 0, %s37
      %s41 = sphi 0, %s40
      %s57 = sphi 0, %s41
      %s63 = sphi 0, %s65
      %s66 = sphi 0, %s63
      %s67 = sphi 0, %s66
      %s83 = sphi 0, %s67
      %s87 = sphi 0, %s87
      %s89 = sphi 0, %s87
      %s90 = sphi 0, %s89
      %s104 = sphi 0, %s90
      %s108 = sphi 0, %s108
      %s110 = sphi 0, %s108
      %s111 = sphi 0, %s110
      %s125 = sphi 0, %s111
      %s129 = sphi 0, %s129
      %s131 = sphi 0, %s129
      %s132 = sphi 0, %s131
      %s146 = sphi 0, %s132
      %s150 = sphi 0, %s150
      %s152 = sphi 0, %s150
      %s153 = sphi 0, %s152
      %s167 = sphi 0, %s153
      %s171 = sphi 0, %s171
      %s173 = sphi 0, %s171
      %s174 = sphi 0, %s173
      %s188 = sphi 0, %s174
      %s192 = sphi 0, %s192
      %s194 = sphi 0, %s192
      %s195 = sphi 0, %s194
      %s209 = sphi 0, %s195
      %s213 = sphi 0, %s213
      %s215 = sphi 0, %s213
      %s216 = sphi 0, %s215
      %s230 = sphi 0, %s216
      %s234 = sphi 0, %s234
      %s236 = sphi 0, %s234
      %s237 = sphi 0, %s236
      %s251 = sphi 0, %s237
      %s255 = sphi 0, %s255
      %s257 = sphi 0, %s255
      %s258 = sphi 0, %s257
      %s272 = sphi 0, %s258
      %s278 = sphi 0, %s280
      %s281 = sphi 0, %s278
      %s282 = sphi 0, %s281
      %s298 = sphi 0, %s282
    $region4: #{tpu_custom_call.1} parent=1 // loop_header_branch
      %30 = sbr.rel (%p28) target = $region8
    $region5: #{tpu_custom_call.1} parent=1 // loop_body
      %s32 = ssub.s32 %s27, 1
      %s33 = ssub.s32 %s27, 2
      %s34 = sadd.s32 %s27, 1
      %s35 = ssub.s32 %s27, %s34
      %p36 = scmp.eq.s32.totalorder %s35, 0
      %s38 = sadd.s32 %s37, 1
      %s39 = scalar_select %p36, %s37, %s38
      %p42 = pneg %p36
      %p43 = scmp.eq.s32.totalorder %s27, 7
      %p44 = por %p42, %p43
      %p45 = scmp.ne.s32.totalorder %s37, %s40
      %p46 = scmp.eq.s32.totalorder %s27, 0
      %p47 = por %p45, %p46
      %p48 = scmp.ne.s32.totalorder %s37, %s40
      %p49 = scmp.eq.s32.totalorder %s32, 7
      %p50 = por %p48, %p49
      %p51 = scmp.ne.s32.totalorder %s40, %s41
      %p52 = scmp.eq.s32.totalorder %s32, 0
      %p53 = por %p51, %p52
      %p54 = scmp.ne.s32.totalorder %s40, %s41
      %p55 = scmp.eq.s32.totalorder %s33, 7
      %p56 = por %p54, %p55
      %p58 = scmp.ne.s32.totalorder %s41, %s57
      %p59 = scmp.eq.s32.totalorder %s33, 0
      %p60 = por %p58, %p59
      %s61 = ssub.s32 %s27, %s34
      %p62 = scmp.eq.s32.totalorder %s61, 0
      %s64 = sadd.s32 %s63, 1
      %s65 = scalar_select %p62, %s63, %s64
      %p68 = pneg %p62
      %p69 = scmp.eq.s32.totalorder %s27, 7
      %p70 = por %p68, %p69
      %p71 = scmp.ne.s32.totalorder %s63, %s66
      %p72 = scmp.eq.s32.totalorder %s27, 0
      %p73 = por %p71, %p72
      %p74 = scmp.ne.s32.totalorder %s63, %s66
      %p75 = scmp.eq.s32.totalorder %s32, 7
      %p76 = por %p74, %p75
      %p77 = scmp.ne.s32.totalorder %s66, %s67
      %p78 = scmp.eq.s32.totalorder %s32, 0
      %p79 = por %p77, %p78
      %p80 = scmp.ne.s32.totalorder %s66, %s67
      %p81 = scmp.eq.s32.totalorder %s33, 7
      %p82 = por %p80, %p81
      %p84 = scmp.ne.s32.totalorder %s67, %s83
      %p85 = scmp.eq.s32.totalorder %s33, 0
      %p86 = por %p84, %p85
      %s88 = sadd.s32 %s87, 1
      %p91 = scmp.eq.s32.totalorder %s27, 7
      %p92 = scmp.ne.s32.totalorder %s87, %s89
      %p93 = scmp.eq.s32.totalorder %s27, 0
      %p94 = por %p92, %p93
      %p95 = scmp.ne.s32.totalorder %s87, %s89
      %p96 = scmp.eq.s32.totalorder %s32, 7
      %p97 = por %p95, %p96
      %p98 = scmp.ne.s32.totalorder %s89, %s90
      %p99 = scmp.eq.s32.totalorder %s32, 0
      %p100 = por %p98, %p99
      %p101 = scmp.ne.s32.totalorder %s89, %s90
      %p102 = scmp.eq.s32.totalorder %s33, 7
      %p103 = por %p101, %p102
      %p105 = scmp.ne.s32.totalorder %s90, %s104
      %p106 = scmp.eq.s32.totalorder %s33, 0
      %p107 = por %p105, %p106
      %s109 = sadd.s32 %s108, 1
      %p112 = scmp.eq.s32.totalorder %s27, 7
      %p113 = scmp.ne.s32.totalorder %s108, %s110
      %p114 = scmp.eq.s32.totalorder %s27, 0
      %p115 = por %p113, %p114
      %p116 = scmp.ne.s32.totalorder %s108, %s110
      %p117 = scmp.eq.s32.totalorder %s32, 7
      %p118 = por %p116, %p117
      %p119 = scmp.ne.s32.totalorder %s110, %s111
      %p120 = scmp.eq.s32.totalorder %s32, 0
      %p121 = por %p119, %p120
      %p122 = scmp.ne.s32.totalorder %s110, %s111
      %p123 = scmp.eq.s32.totalorder %s33, 7
      %p124 = por %p122, %p123
      %p126 = scmp.ne.s32.totalorder %s111, %s125
      %p127 = scmp.eq.s32.totalorder %s33, 0
      %p128 = por %p126, %p127
      %s130 = sadd.s32 %s129, 1
      %p133 = scmp.eq.s32.totalorder %s27, 7
      %p134 = scmp.ne.s32.totalorder %s129, %s131
      %p135 = scmp.eq.s32.totalorder %s27, 0
      %p136 = por %p134, %p135
      %p137 = scmp.ne.s32.totalorder %s129, %s131
      %p138 = scmp.eq.s32.totalorder %s32, 7
      %p139 = por %p137, %p138
      %p140 = scmp.ne.s32.totalorder %s131, %s132
      %p141 = scmp.eq.s32.totalorder %s32, 0
      %p142 = por %p140, %p141
      %p143 = scmp.ne.s32.totalorder %s131, %s132
      %p144 = scmp.eq.s32.totalorder %s33, 7
      %p145 = por %p143, %p144
      %p147 = scmp.ne.s32.totalorder %s132, %s146
      %p148 = scmp.eq.s32.totalorder %s33, 0
      %p149 = por %p147, %p148
      %s151 = sadd.s32 %s150, 1
      %p154 = scmp.eq.s32.totalorder %s27, 7
      %p155 = scmp.ne.s32.totalorder %s150, %s152
      %p156 = scmp.eq.s32.totalorder %s27, 0
      %p157 = por %p155, %p156
      %p158 = scmp.ne.s32.totalorder %s150, %s152
      %p159 = scmp.eq.s32.totalorder %s32, 7
      %p160 = por %p158, %p159
      %p161 = scmp.ne.s32.totalorder %s152, %s153
      %p162 = scmp.eq.s32.totalorder %s32, 0
      %p163 = por %p161, %p162
      %p164 = scmp.ne.s32.totalorder %s152, %s153
      %p165 = scmp.eq.s32.totalorder %s33, 7
      %p166 = por %p164, %p165
      %p168 = scmp.ne.s32.totalorder %s153, %s167
      %p169 = scmp.eq.s32.totalorder %s33, 0
      %p170 = por %p168, %p169
      %s172 = sadd.s32 %s171, 1
      %p175 = scmp.eq.s32.totalorder %s27, 7
      %p176 = scmp.ne.s32.totalorder %s171, %s173
      %p177 = scmp.eq.s32.totalorder %s27, 0
      %p178 = por %p176, %p177
      %p179 = scmp.ne.s32.totalorder %s171, %s173
      %p180 = scmp.eq.s32.totalorder %s32, 7
      %p181 = por %p179, %p180
      %p182 = scmp.ne.s32.totalorder %s173, %s174
      %p183 = scmp.eq.s32.totalorder %s32, 0
      %p184 = por %p182, %p183
      %p185 = scmp.ne.s32.totalorder %s173, %s174
      %p186 = scmp.eq.s32.totalorder %s33, 7
      %p187 = por %p185, %p186
      %p189 = scmp.ne.s32.totalorder %s174, %s188
      %p190 = scmp.eq.s32.totalorder %s33, 0
      %p191 = por %p189, %p190
      %s193 = sadd.s32 %s192, 1
      %p196 = scmp.eq.s32.totalorder %s27, 7
      %p197 = scmp.ne.s32.totalorder %s192, %s194
      %p198 = scmp.eq.s32.totalorder %s27, 0
      %p199 = por %p197, %p198
      %p200 = scmp.ne.s32.totalorder %s192, %s194
      %p201 = scmp.eq.s32.totalorder %s32, 7
      %p202 = por %p200, %p201
      %p203 = scmp.ne.s32.totalorder %s194, %s195
      %p204 = scmp.eq.s32.totalorder %s32, 0
      %p205 = por %p203, %p204
      %p206 = scmp.ne.s32.totalorder %s194, %s195
      %p207 = scmp.eq.s32.totalorder %s33, 7
      %p208 = por %p206, %p207
      %p210 = scmp.ne.s32.totalorder %s195, %s209
      %p211 = scmp.eq.s32.totalorder %s33, 0
      %p212 = por %p210, %p211
      %s214 = sadd.s32 %s213, 1
      %p217 = scmp.eq.s32.totalorder %s27, 7
      %p218 = scmp.ne.s32.totalorder %s213, %s215
      %p219 = scmp.eq.s32.totalorder %s27, 0
      %p220 = por %p218, %p219
      %p221 = scmp.ne.s32.totalorder %s213, %s215
      %p222 = scmp.eq.s32.totalorder %s32, 7
      %p223 = por %p221, %p222
      %p224 = scmp.ne.s32.totalorder %s215, %s216
      %p225 = scmp.eq.s32.totalorder %s32, 0
      %p226 = por %p224, %p225
      %p227 = scmp.ne.s32.totalorder %s215, %s216
      %p228 = scmp.eq.s32.totalorder %s33, 7
      %p229 = por %p227, %p228
      %p231 = scmp.ne.s32.totalorder %s216, %s230
      %p232 = scmp.eq.s32.totalorder %s33, 0
      %p233 = por %p231, %p232
      %s235 = sadd.s32 %s234, 1
      %p238 = scmp.eq.s32.totalorder %s27, 7
      %p239 = scmp.ne.s32.totalorder %s234, %s236
      %p240 = scmp.eq.s32.totalorder %s27, 0
      %p241 = por %p239, %p240
      %p242 = scmp.ne.s32.totalorder %s234, %s236
      %p243 = scmp.eq.s32.totalorder %s32, 7
      %p244 = por %p242, %p243
      %p245 = scmp.ne.s32.totalorder %s236, %s237
      %p246 = scmp.eq.s32.totalorder %s32, 0
      %p247 = por %p245, %p246
      %p248 = scmp.ne.s32.totalorder %s236, %s237
      %p249 = scmp.eq.s32.totalorder %s33, 7
      %p250 = por %p248, %p249
      %p252 = scmp.ne.s32.totalorder %s237, %s251
      %p253 = scmp.eq.s32.totalorder %s33, 0
      %p254 = por %p252, %p253
      %s256 = sadd.s32 %s255, 1
      %p259 = scmp.eq.s32.totalorder %s27, 7
      %p260 = scmp.ne.s32.totalorder %s255, %s257
      %p261 = scmp.eq.s32.totalorder %s27, 0
      %p262 = por %p260, %p261
      %p263 = scmp.ne.s32.totalorder %s255, %s257
      %p264 = scmp.eq.s32.totalorder %s32, 7
      %p265 = por %p263, %p264
      %p266 = scmp.ne.s32.totalorder %s257, %s258
      %p267 = scmp.eq.s32.totalorder %s32, 0
      %p268 = por %p266, %p267
      %p269 = scmp.ne.s32.totalorder %s257, %s258
      %p270 = scmp.eq.s32.totalorder %s33, 7
      %p271 = por %p269, %p270
      %p273 = scmp.ne.s32.totalorder %s258, %s272
      %p274 = scmp.eq.s32.totalorder %s33, 0
      %p275 = por %p273, %p274
      %s276 = ssub.s32 %s27, %s34
      %p277 = scmp.eq.s32.totalorder %s276, 0
      %s279 = sadd.s32 %s278, 1
      %s280 = scalar_select %p277, %s278, %s279
      %p283 = pneg %p277
      %p284 = scmp.eq.s32.totalorder %s27, 7
      %p285 = por %p283, %p284
      %p286 = scmp.ne.s32.totalorder %s278, %s281
      %p287 = scmp.eq.s32.totalorder %s27, 0
      %p288 = por %p286, %p287
      %p289 = scmp.ne.s32.totalorder %s278, %s281
      %p290 = scmp.eq.s32.totalorder %s32, 7
      %p291 = por %p289, %p290
      %p292 = scmp.ne.s32.totalorder %s281, %s282
      %p293 = scmp.eq.s32.totalorder %s32, 0
      %p294 = por %p292, %p293
      %p295 = scmp.ne.s32.totalorder %s281, %s282
      %p296 = scmp.eq.s32.totalorder %s33, 7
      %p297 = por %p295, %p296
      %p299 = scmp.ne.s32.totalorder %s282, %s298
      %p300 = scmp.eq.s32.totalorder %s33, 0
      %p301 = por %p299, %p300
      %p302 = scmp.le.s32.totalorder 1, %s27
      %p303 = scmp.lt.s32.totalorder %s27, 9
      %p304 = pnand %p302, %p303
      %p305 = pneg %p304
      // Predicated region
      $region9: #{tpu_custom_call.1} parent=5 // pred_check
        _
      $region10: #{tpu_custom_call.1} parent=5 // pred_check_branch
        %307 = sbr.rel (%p304) target = $region12
      $region11: #{tpu_custom_call.1} parent=5 // pred_region
        %s308 = ssub.s32 %s27, 1
        // Predicated region
        $region13: #{tpu_custom_call.1} parent=11 // pred_check
          %p309 = pneg %p100
        $region14: #{tpu_custom_call.1} parent=11 // pred_check_branch
          %311 = sbr.rel (%p309) target = $region16
        $region15: #{tpu_custom_call.1} parent=11 // pred_region
          _
        $region16: #{tpu_custom_call.1} parent=11 // pred_fallthru
          _
        // Predicated region
        $region17: #{tpu_custom_call.1} parent=11 // pred_check
          %p312 = pneg %p121
        $region18: #{tpu_custom_call.1} parent=11 // pred_check_branch
          %314 = sbr.rel (%p312) target = $region20
        $region19: #{tpu_custom_call.1} parent=11 // pred_region
          _
        $region20: #{tpu_custom_call.1} parent=11 // pred_fallthru
          _
        // Predicated region
        $region21: #{tpu_custom_call.1} parent=11 // pred_check
          %p315 = pneg %p142
        $region22: #{tpu_custom_call.1} parent=11 // pred_check_branch
          %317 = sbr.rel (%p315) target = $region24
        $region23: #{tpu_custom_call.1} parent=11 // pred_region
          %s319 = ssub.s32 16, 16
          %320 = vsyncadd [#allocation6], %s319
          %s322 = sshll.u32 [#allocation7], 4
          %s323 = int_to_ptr.vmem [resolvable:$true] %s322
          %325 = dma.hbm_to_vmem [thread:$0]  %s4, 16, %s323, [#allocation6]
        $region24: #{tpu_custom_call.1} parent=11 // pred_fallthru
          _
        // Predicated region
        $region25: #{tpu_custom_call.1} parent=11 // pred_check
          %p326 = pneg %p163
        $region26: #{tpu_custom_call.1} parent=11 // pred_check_branch
          %328 = sbr.rel (%p326) target = $region28
        $region27: #{tpu_custom_call.1} parent=11 // pred_region
          _
        $region28: #{tpu_custom_call.1} parent=11 // pred_fallthru
          _
        // Predicated region
        $region29: #{tpu_custom_call.1} parent=11 // pred_check
          %p329 = pneg %p184
        $region30: #{tpu_custom_call.1} parent=11 // pred_check_branch
          %331 = sbr.rel (%p329) target = $region32
        $region31: #{tpu_custom_call.1} parent=11 // pred_region
          %s333 = ssub.s32 16, 16
          %334 = vsyncadd [#allocation9], %s333
          %s336 = sshll.u32 [#allocation8], 4
          %s337 = int_to_ptr.vmem [resolvable:$true] %s336
          %339 = dma.hbm_to_vmem [thread:$0]  %s6, 16, %s337, [#allocation9]
        $region32: #{tpu_custom_call.1} parent=11 // pred_fallthru
          _
        // Predicated region
        $region33: #{tpu_custom_call.1} parent=11 // pred_check
          %p340 = pneg %p205
        $region34: #{tpu_custom_call.1} parent=11 // pred_check_branch
          %342 = sbr.rel (%p340) target = $region36
        $region35: #{tpu_custom_call.1} parent=11 // pred_region
          _
        $region36: #{tpu_custom_call.1} parent=11 // pred_fallthru
          _
        // Predicated region
        $region37: #{tpu_custom_call.1} parent=11 // pred_check
          %p343 = pneg %p226
        $region38: #{tpu_custom_call.1} parent=11 // pred_check_branch
          %345 = sbr.rel (%p343) target = $region40
        $region39: #{tpu_custom_call.1} parent=11 // pred_region
          %s347 = ssub.s32 16, 16
          %348 = vsyncadd [#allocation9], %s347
          %s350 = sshll.u32 [#allocation10], 4
          %s351 = int_to_ptr.vmem [resolvable:$true] %s350
          %353 = dma.hbm_to_vmem [thread:$0]  %s8, 16, %s351, [#allocation9]
        $region40: #{tpu_custom_call.1} parent=11 // pred_fallthru
          _
        // Predicated region
        $region41: #{tpu_custom_call.1} parent=11 // pred_check
          %p354 = pneg %p247
        $region42: #{tpu_custom_call.1} parent=11 // pred_check_branch
          %356 = sbr.rel (%p354) target = $region44
        $region43: #{tpu_custom_call.1} parent=11 // pred_region
          _
        $region44: #{tpu_custom_call.1} parent=11 // pred_fallthru
          _
        // Predicated region
        $region45: #{tpu_custom_call.1} parent=11 // pred_check
          %p357 = pneg %p268
        $region46: #{tpu_custom_call.1} parent=11 // pred_check_branch
          %359 = sbr.rel (%p357) target = $region48
        $region47: #{tpu_custom_call.1} parent=11 // pred_region
          _
        $region48: #{tpu_custom_call.1} parent=11 // pred_fallthru
          _
      $region12: #{tpu_custom_call.1} parent=5 // pred_fallthru
        _
      %p360 = scmp.lt.s32.totalorder %s27, 8
      // Predicated region
      $region49: #{tpu_custom_call.1} parent=5 // pred_check
        %p361 = pneg %p360
      $region50: #{tpu_custom_call.1} parent=5 // pred_check_branch
        %363 = sbr.rel (%p361) target = $region52
      $region51: #{tpu_custom_call.1} parent=5 // pred_region
        // Predicated region
        $region53: #{tpu_custom_call.1} parent=51 // pred_check
          %p364 = pneg %p47
        $region54: #{tpu_custom_call.1} parent=51 // pred_check_branch
          %366 = sbr.rel (%p364) target = $region56
        $region55: #{tpu_custom_call.1} parent=51 // pred_region
          %s367 = sand.u32 %s37, 1
          %s368 = scalar_lea.sflag [#allocation3], %s367
          %s369 = sand.u32 %s37, 1
          %s370 = smul.addr %s369, 8
          %s371 = scalar_lea.vmem [#allocation2], %s370
          %s373 = ssub.s32 128, 128
          %374 = vsyncadd %s368, %s373
          %s375 = smul.addr %s27, 2
          %s376 = smul.addr %s375, 64
          %s377 = scalar_lea.hbm %s0, %s376
          %s378 = sshll.u32 %s371, 4
          %s379 = int_to_ptr.vmem [resolvable:$true] %s378
          %384 = dma.hbm_to_vmem [thread:$0]  %s377, 128, %s379, %s368, 64, 64, 4
        $region56: #{tpu_custom_call.1} parent=51 // pred_fallthru
          _
        // Predicated region
        $region57: #{tpu_custom_call.1} parent=51 // pred_check
          %p385 = pneg %p73
        $region58: #{tpu_custom_call.1} parent=51 // pred_check_branch
          %387 = sbr.rel (%p385) target = $region60
        $region59: #{tpu_custom_call.1} parent=51 // pred_region
          %s388 = sand.u32 %s27, 1
          %s389 = scalar_lea.sflag [#allocation6], %s388
          %s390 = sand.u32 %s63, 1
          %s391 = smul.addr %s390, 8
          %s392 = scalar_lea.vmem [#allocation5], %s391
          %s394 = ssub.s32 128, 128
          %395 = vsyncadd %s389, %s394
          %s396 = smul.addr %s27, 2
          %s397 = smul.addr %s396, 64
          %s398 = scalar_lea.hbm %s1, %s397
          %s399 = sshll.u32 %s392, 4
          %s400 = int_to_ptr.vmem [resolvable:$true] %s399
          %405 = dma.hbm_to_vmem [thread:$0]  %s398, 128, %s400, %s389, 64, 64, 4
        $region60: #{tpu_custom_call.1} parent=51 // pred_fallthru
          _
      $region52: #{tpu_custom_call.1} parent=5 // pred_fallthru
        _
      %p406 = scmp.le.s32.totalorder 1, %s27
      %p407 = scmp.lt.s32.totalorder %s27, 9
      %p408 = pnand %p406, %p407
      %p409 = pneg %p408
      // Predicated region
      $region61: #{tpu_custom_call.1} parent=5 // pred_check
        _
      $region62: #{tpu_custom_call.1} parent=5 // pred_check_branch
        %411 = sbr.rel (%p408) target = $region64
      $region63: #{tpu_custom_call.1} parent=5 // pred_region
        %s412 = ssub.s32 %s27, 1
        %s413 = sand.u32 %s40, 1
        %s414 = scalar_lea.sflag [#allocation3], %s413
        %s415 = sand.u32 %s40, 1
        %s416 = smul.addr %s415, 8
        %s417 = scalar_lea.vmem [#allocation2], %s416
        // Predicated region
        $region65: #{tpu_custom_call.1} parent=63 // pred_check
          %p418 = pneg %p53
        $region66: #{tpu_custom_call.1} parent=63 // pred_check_branch
          %420 = sbr.rel (%p418) target = $region68
        $region67: #{tpu_custom_call.1} parent=63 // pred_region
          %421 = dma.done %s414, 128
        $region68: #{tpu_custom_call.1} parent=63 // pred_fallthru
          _
        %s422 = sand.u32 %s32, 1
        %s423 = scalar_lea.sflag [#allocation6], %s422
        %s424 = sand.u32 %s66, 1
        %s425 = smul.addr %s424, 8
        %s426 = scalar_lea.vmem [#allocation5], %s425
        // Predicated region
        $region69: #{tpu_custom_call.1} parent=63 // pred_check
          %p427 = pneg %p79
        $region70: #{tpu_custom_call.1} parent=63 // pred_check_branch
          %429 = sbr.rel (%p427) target = $region72
        $region71: #{tpu_custom_call.1} parent=63 // pred_region
          %430 = dma.done %s423, 128
        $region72: #{tpu_custom_call.1} parent=63 // pred_fallthru
          _
        // Predicated region
        $region73: #{tpu_custom_call.1} parent=63 // pred_check
          %p431 = pneg %p142
        $region74: #{tpu_custom_call.1} parent=63 // pred_check_branch
          %433 = sbr.rel (%p431) target = $region76
        $region75: #{tpu_custom_call.1} parent=63 // pred_region
          %434 = dma.done [#allocation6], 16
        $region76: #{tpu_custom_call.1} parent=63 // pred_fallthru
          _
        // Predicated region
        $region77: #{tpu_custom_call.1} parent=63 // pred_check
          %p435 = pneg %p184
        $region78: #{tpu_custom_call.1} parent=63 // pred_check_branch
          %437 = sbr.rel (%p435) target = $region80
        $region79: #{tpu_custom_call.1} parent=63 // pred_region
          %438 = dma.done [#allocation9], 16
        $region80: #{tpu_custom_call.1} parent=63 // pred_fallthru
          _
        // Predicated region
        $region81: #{tpu_custom_call.1} parent=63 // pred_check
          %p439 = pneg %p226
        $region82: #{tpu_custom_call.1} parent=63 // pred_check_branch
          %441 = sbr.rel (%p439) target = $region84
        $region83: #{tpu_custom_call.1} parent=63 // pred_region
          %442 = dma.done [#allocation9], 16
        $region84: #{tpu_custom_call.1} parent=63 // pred_fallthru
          _
        %s443 = sand.u32 %s40, 1
        %s444 = scalar_lea.sflag [#allocation3], %s443
        %s445 = sand.u32 %s40, 1
        %s446 = smul.addr %s445, 8
        %s447 = scalar_lea.vmem [#allocation2], %s446
        %p448 = pneg %p53
        %p449 = pneg %p50
        %s450 = sand.u32 %s32, 1
        %s451 = scalar_lea.sflag [#allocation6], %s450
        %s452 = sand.u32 %s66, 1
        %s453 = smul.addr %s452, 8
        %s454 = scalar_lea.vmem [#allocation5], %s453
        %p455 = pneg %p79
        %p456 = pneg %p76
        %p457 = pneg %p100
        %p458 = pneg %p97
        %p459 = pneg %p121
        %p460 = pneg %p118
        %p461 = pneg %p142
        %p462 = pneg %p139
        %p463 = pneg %p163
        %p464 = pneg %p160
        %p465 = pneg %p184
        %p466 = pneg %p181
        %p467 = pneg %p205
        %p468 = pneg %p202
        %p469 = pneg %p226
        %p470 = pneg %p223
        %p471 = pneg %p247
        %p472 = pneg %p244
        %p473 = pneg %p268
        %p474 = pneg %p265
        %p475 = pneg %p294
        %p476 = pneg %p291
        %s477 = sand.u32 %s281, 1
        %s478 = scalar_lea.sflag [#allocation4], %s477
        %s479 = sand.u32 %s281, 1
        %s480 = smul.addr %s479, 16
        %s481 = scalar_lea.vmem [#allocation11], %s480
        %v483 = vld [vmem:[%s417] sm:$0xf]
        %v484 = vld [vmem:[%s417 + $0x4] sm:$0xf]
        %v485 = vld [vmem:[%s426] sm:$0xf]
        %v486 = vld [vmem:[%s426 + $0x4] sm:$0xf]
        %v487 = vld [vmem:[%s2] sm:$0xf]
        %v488 = vld [vmem:[%s2 + $0x4] sm:$0xf]
        %v489 = vld [vmem:[%s2 + $0x8] sm:$0xf]
        %v490 = vld [vmem:[%s2 + $0xc] sm:$0xf]
        %v491 = vld [vmem:[%s2 + $0x10] sm:$0xf]
        %v492 = vld [vmem:[%s2 + $0x14] sm:$0xf]
        %v493 = vld [vmem:[%s2 + $0x18] sm:$0xf]
        %v494 = vld [vmem:[%s2 + $0x1c] sm:$0xf]
        %v495 = vld [vmem:[%s3] sm:$0xf]
        %v496 = vld [vmem:[%s3 + $0x4] sm:$0xf]
        %v497 = vld [vmem:[%s3 + $0x8] sm:$0xf]
        %v498 = vld [vmem:[%s3 + $0xc] sm:$0xf]
        %v499 = vld [vmem:[#allocation7] sm:$0x1]
        %v501 = vlaneseq
        %v502 = vshrl.u32 %v501, 7
        %v503 = vsub.s32 0, %v502
        %v504 = vrot.slane %v499, %v503
        %v508 = vunpack.c.l.b16 %v485
        %v509 = vunpack.c.l.b16 %v486
        %v510 = vpack.c.b16 %v509, %v508
        %v515 = vunpack.c.l.b16 %v495
        %v516 = vunpack.c.l.b16 %v496
        %v517 = vunpack.c.l.b16 %v497
        %v518 = vunpack.c.l.b16 %v498
        %v519 = vpack.c.b16 %v516, %v515
        %v520 = vpack.c.b16 %v518, %v517
        %vm523 = vcmask 261120
        %v525 = vsel %vm523, %v510, 0
        %527 = vmatprep.subr.bf16.mxu0 0
        %528 = vmatpush1.bf16.msra.mxu0 0
        %529 = vmatprep.subr.bf16.mxu0 0
        %530 = vmatpush1.bf16.msra.mxu0 0
        %531 = vmatprep.subr.bf16.mxu0 0
        %532 = vmatpush1.bf16.msra.mxu0 0
        %533 = vmatprep.subr.bf16.mxu0 0
        %534 = vmatpush1.bf16.msra.mxu0 0
        %535 = vmatprep.subr.bf16.mxu0 0
        %536 = vmatpush1.bf16.msra.mxu0 0
        %537 = vmatprep.subr.bf16.mxu0 0
        %538 = vmatpush1.bf16.msra.mxu0 0
        %539 = vmatprep.subr.bf16.mxu0 0
        %540 = vmatpush1.bf16.msra.mxu0 %v520
        %541 = vmatprep.subr.bf16.mxu0 0
        %542 = vmatpush1.bf16.msra.mxu0 %v519
        %543 = vmatprep.subr.bf16.mxu0 0
        %544 = vmatpush2.bf16.msra.mxu0 0
        %545 = vmatprep.subr.bf16.mxu0 0
        %546 = vmatpush2.bf16.msra.mxu0 0
        %547 = vmatprep.subr.bf16.mxu0 0
        %548 = vmatpush2.bf16.msra.mxu0 0
        %549 = vmatprep.subr.bf16.mxu0 0
        %550 = vmatpush2.bf16.msra.mxu0 0
        %551 = vmatprep.subr.bf16.mxu0 0
        %552 = vmatpush2.bf16.msra.mxu0 0
        %553 = vmatprep.subr.bf16.mxu0 0
        %554 = vmatpush2.bf16.msra.mxu0 0
        %555 = vmatprep.subr.bf16.mxu0 0
        %556 = vmatpush2.bf16.msra.mxu0 0
        %557 = vmatprep.subr.bf16.mxu0 0
        %558 = vmatpush2.bf16.msra.mxu0 0
        %559 = vmatprep.mubr.bf16.mxu0 0
        %560 = vmatmul.mubr.bf16.gmra.mxu0 %v525
        %v561 = vpop.f32.mrf.mxu0
        %v562 = vadd.f32 %v504, %v561
        %v563 = vpop.f32.mrf.mxu0
        %v564 = vpop.f32.mrf.mxu0
        %v565 = vadd.f32 %v504, %v564
        %v566 = vpop.f32.mrf.mxu0
        %567 = vdwg.mxu0
        %v568 = vld [vmem:[%s5] sm:$0xf]
        %v569 = vld [vmem:[%s5 + $0x4] sm:$0xf]
        %v570 = vld [vmem:[%s5 + $0x8] sm:$0xf]
        %v571 = vld [vmem:[%s5 + $0xc] sm:$0xf]
        %v572 = vld [vmem:[#allocation8] sm:$0x1]
        %v574 = vlaneseq
        %v575 = vshrl.u32 %v574, 7
        %v576 = vsub.s32 0, %v575
        %v577 = vrot.slane %v572, %v576
        %v583 = vunpack.c.l.b16 %v568
        %v584 = vunpack.c.l.b16 %v569
        %v585 = vunpack.c.l.b16 %v570
        %v586 = vunpack.c.l.b16 %v571
        %v587 = vpack.c.b16 %v584, %v583
        %v588 = vpack.c.b16 %v586, %v585
        %591 = vmatprep.subr.bf16.mxu0 0
        %592 = vmatpush1.bf16.msra.mxu0 0
        %593 = vmatprep.subr.bf16.mxu0 0
        %594 = vmatpush1.bf16.msra.mxu0 0
        %595 = vmatprep.subr.bf16.mxu0 0
        %596 = vmatpush1.bf16.msra.mxu0 0
        %597 = vmatprep.subr.bf16.mxu0 0
        %598 = vmatpush1.bf16.msra.mxu0 0
        %599 = vmatprep.subr.bf16.mxu0 0
        %600 = vmatpush1.bf16.msra.mxu0 0
        %601 = vmatprep.subr.bf16.mxu0 0
        %602 = vmatpush1.bf16.msra.mxu0 0
        %603 = vmatprep.subr.bf16.mxu0 0
        %604 = vmatpush1.bf16.msra.mxu0 %v588
        %605 = vmatprep.subr.bf16.mxu0 0
        %606 = vmatpush1.bf16.msra.mxu0 %v587
        %607 = vmatprep.subr.bf16.mxu0 0
        %608 = vmatpush2.bf16.msra.mxu0 0
        %609 = vmatprep.subr.bf16.mxu0 0
        %610 = vmatpush2.bf16.msra.mxu0 0
        %611 = vmatprep.subr.bf16.mxu0 0
        %612 = vmatpush2.bf16.msra.mxu0 0
        %613 = vmatprep.subr.bf16.mxu0 0
        %614 = vmatpush2.bf16.msra.mxu0 0
        %615 = vmatprep.subr.bf16.mxu0 0
        %616 = vmatpush2.bf16.msra.mxu0 0
        %617 = vmatprep.subr.bf16.mxu0 0
        %618 = vmatpush2.bf16.msra.mxu0 0
        %619 = vmatprep.subr.bf16.mxu0 0
        %620 = vmatpush2.bf16.msra.mxu0 0
        %621 = vmatprep.subr.bf16.mxu0 0
        %622 = vmatpush2.bf16.msra.mxu0 0
        %623 = vmatprep.mubr.bf16.mxu0 0
        %624 = vmatmul.mubr.bf16.gmra.mxu0 %v525
        %v625 = vpop.f32.mrf.mxu0
        %v626 = vadd.f32 %v577, %v625
        %v627 = vpop.f32.mrf.mxu0
        %v628 = vpop.f32.mrf.mxu0
        %v629 = vadd.f32 %v577, %v628
        %v630 = vpop.f32.mrf.mxu0
        %631 = vdwg.mxu0
        %v632 = vld [vmem:[%s7] sm:$0xf]
        %v633 = vld [vmem:[%s7 + $0x4] sm:$0xf]
        %v634 = vld [vmem:[%s7 + $0x8] sm:$0xf]
        %v635 = vld [vmem:[%s7 + $0xc] sm:$0xf]
        %v636 = vld [vmem:[#allocation10] sm:$0x1]
        %v638 = vlaneseq
        %v639 = vshrl.u32 %v638, 7
        %v640 = vsub.s32 0, %v639
        %v641 = vrot.slane %v636, %v640
        %v647 = vunpack.c.l.b16 %v632
        %v648 = vunpack.c.l.b16 %v633
        %v649 = vunpack.c.l.b16 %v634
        %v650 = vunpack.c.l.b16 %v635
        %v651 = vpack.c.b16 %v648, %v647
        %v652 = vpack.c.b16 %v650, %v649
        %655 = vmatprep.subr.bf16.mxu0 0
        %656 = vmatpush1.bf16.msra.mxu0 0
        %657 = vmatprep.subr.bf16.mxu0 0
        %658 = vmatpush1.bf16.msra.mxu0 0
        %659 = vmatprep.subr.bf16.mxu0 0
        %660 = vmatpush1.bf16.msra.mxu0 0
        %661 = vmatprep.subr.bf16.mxu0 0
        %662 = vmatpush1.bf16.msra.mxu0 0
        %663 = vmatprep.subr.bf16.mxu0 0
        %664 = vmatpush1.bf16.msra.mxu0 0
        %665 = vmatprep.subr.bf16.mxu0 0
        %666 = vmatpush1.bf16.msra.mxu0 0
        %667 = vmatprep.subr.bf16.mxu0 0
        %668 = vmatpush1.bf16.msra.mxu0 %v652
        %669 = vmatprep.subr.bf16.mxu0 0
        %670 = vmatpush1.bf16.msra.mxu0 %v651
        %671 = vmatprep.subr.bf16.mxu0 0
        %672 = vmatpush2.bf16.msra.mxu0 0
        %673 = vmatprep.subr.bf16.mxu0 0
        %674 = vmatpush2.bf16.msra.mxu0 0
        %675 = vmatprep.subr.bf16.mxu0 0
        %676 = vmatpush2.bf16.msra.mxu0 0
        %677 = vmatprep.subr.bf16.mxu0 0
        %678 = vmatpush2.bf16.msra.mxu0 0
        %679 = vmatprep.subr.bf16.mxu0 0
        %680 = vmatpush2.bf16.msra.mxu0 0
        %681 = vmatprep.subr.bf16.mxu0 0
        %682 = vmatpush2.bf16.msra.mxu0 0
        %683 = vmatprep.subr.bf16.mxu0 0
        %684 = vmatpush2.bf16.msra.mxu0 0
        %685 = vmatprep.subr.bf16.mxu0 0
        %686 = vmatpush2.bf16.msra.mxu0 0
        %687 = vmatprep.mubr.bf16.mxu0 0
        %688 = vmatmul.mubr.bf16.gmra.mxu0 %v525
        %v689 = vpop.f32.mrf.mxu0
        %v690 = vadd.f32 %v641, %v689
        %v691 = vpop.f32.mrf.mxu0
        %v692 = vpop.f32.mrf.mxu0
        %v693 = vadd.f32 %v641, %v692
        %v694 = vpop.f32.mrf.mxu0
        %695 = vdwg.mxu0
        %v696 = vpack.c.bf16 %v629, %v626
        %v698 = vunpack.c.l.b16 %v696
        %v699 = vunpack.c.h.b16 %v696
        %v700 = vpack.c.b16 %v698, %v698
        %v701 = vpack.c.b16 %v699, %v699
        %v704 = vmul.bf16 %v487, %v700
        %v705 = vmul.bf16 %v488, %v701
        %v706 = vmul.bf16 %v489, %v700
        %v707 = vmul.bf16 %v490, %v701
        %v708 = vmul.bf16 %v491, %v700
        %v709 = vmul.bf16 %v492, %v701
        %v710 = vmul.bf16 %v493, %v700
        %v711 = vmul.bf16 %v494, %v701
        %v712 = vpack.c.bf16 %v565, %v562
        %v721 = vunpack.c.l.b16 %v704
        %v722 = vunpack.c.l.b16 %v705
        %v723 = vunpack.c.l.b16 %v706
        %v724 = vunpack.c.l.b16 %v707
        %v725 = vunpack.c.l.b16 %v708
        %v726 = vunpack.c.l.b16 %v709
        %v727 = vunpack.c.l.b16 %v710
        %v728 = vunpack.c.l.b16 %v711
        %v729 = vpack.c.b16 %v722, %v721
        %v730 = vpack.c.b16 %v724, %v723
        %v731 = vpack.c.b16 %v726, %v725
        %v732 = vpack.c.b16 %v728, %v727
        %v734 = vsel %vm523, %v729, 0
        %v737 = vsel %vm523, %v730, 0
        %v740 = vsel %vm523, %v731, 0
        %v743 = vsel %vm523, %v732, 0
        %v746 = vsel %vm523, %v712, 0
        %748 = vmatprep.subr.bf16.mxu0 0
        %749 = vmatpush1.bf16.xpose.msra.mxu0 0
        %750 = vmatprep.subr.bf16.mxu0 0
        %751 = vmatpush1.bf16.xpose.msra.mxu0 0
        %752 = vmatprep.subr.bf16.mxu0 0
        %753 = vmatpush1.bf16.xpose.msra.mxu0 0
        %754 = vmatprep.subr.bf16.mxu0 0
        %755 = vmatpush1.bf16.xpose.msra.mxu0 0
        %756 = vmatprep.subr.bf16.mxu0 0
        %757 = vmatpush1.bf16.xpose.msra.mxu0 0
        %758 = vmatprep.subr.bf16.mxu0 0
        %759 = vmatpush1.bf16.xpose.msra.mxu0 0
        %760 = vmatprep.subr.bf16.mxu0 0
        %761 = vmatpush1.bf16.xpose.msra.mxu0 0
        %762 = vmatprep.subr.bf16.mxu0 0
        %763 = vmatpush1.bf16.xpose.msra.mxu0 %v746
        %764 = vmatprep.subr.bf16.mxu0 0
        %765 = vmatpush2.bf16.xpose.msra.mxu0 0
        %766 = vmatprep.subr.bf16.mxu0 0
        %767 = vmatpush2.bf16.xpose.msra.mxu0 0
        %768 = vmatprep.subr.bf16.mxu0 0
        %769 = vmatpush2.bf16.xpose.msra.mxu0 0
        %770 = vmatprep.subr.bf16.mxu0 0
        %771 = vmatpush2.bf16.xpose.msra.mxu0 0
        %772 = vmatprep.subr.bf16.mxu0 0
        %773 = vmatpush2.bf16.xpose.msra.mxu0 0
        %774 = vmatprep.subr.bf16.mxu0 0
        %775 = vmatpush2.bf16.xpose.msra.mxu0 0
        %776 = vmatprep.subr.bf16.mxu0 0
        %777 = vmatpush2.bf16.xpose.msra.mxu0 0
        %778 = vmatprep.subr.bf16.mxu0 0
        %779 = vmatpush2.bf16.xpose.msra.mxu0 0
        %780 = vmatprep.mubr.bf16.mxu0 0
        %781 = vmatmul.mubr.bf16.gmra.mxu0 %v734
        %v782 = vpop.f32.mrf.mxu0
        %v783 = vadd.f32 0.0, %v782
        %v784 = vpop.f32.mrf.mxu0
        %v785 = vpop.f32.mrf.mxu0
        %v786 = vadd.f32 0.0, %v785
        %v787 = vpop.f32.mrf.mxu0
        %788 = vmatprep.mubr.bf16.mxu0 0
        %789 = vmatmul.mubr.bf16.gmra.mxu0 %v737
        %v790 = vpop.f32.mrf.mxu0
        %v791 = vadd.f32 0.0, %v790
        %v792 = vpop.f32.mrf.mxu0
        %v793 = vpop.f32.mrf.mxu0
        %v794 = vadd.f32 0.0, %v793
        %v795 = vpop.f32.mrf.mxu0
        %796 = vmatprep.mubr.bf16.mxu0 0
        %797 = vmatmul.mubr.bf16.gmra.mxu0 %v740
        %v798 = vpop.f32.mrf.mxu0
        %v799 = vadd.f32 0.0, %v798
        %v800 = vpop.f32.mrf.mxu0
        %v801 = vpop.f32.mrf.mxu0
        %v802 = vadd.f32 0.0, %v801
        %v803 = vpop.f32.mrf.mxu0
        %804 = vmatprep.mubr.bf16.mxu0 0
        %805 = vmatmul.mubr.bf16.gmra.mxu0 %v743
        %v806 = vpop.f32.mrf.mxu0
        %v807 = vadd.f32 0.0, %v806
        %v808 = vpop.f32.mrf.mxu0
        %v809 = vpop.f32.mrf.mxu0
        %v810 = vadd.f32 0.0, %v809
        %v811 = vpop.f32.mrf.mxu0
        %812 = vdwg.mxu0
        %v813 = vmul.f32 %v783, 0.35355338
        %v814 = vmul.f32 %v786, 0.35355338
        %v815 = vmul.f32 %v791, 0.35355338
        %v816 = vmul.f32 %v794, 0.35355338
        %v817 = vmul.f32 %v799, 0.35355338
        %v818 = vmul.f32 %v802, 0.35355338
        %v819 = vmul.f32 %v807, 0.35355338
        %v820 = vmul.f32 %v810, 0.35355338
        %v821 = vunpack.c.l.bf16 %v483
        %v822 = vunpack.c.l.bf16 %v484
        %vm823 = vcmp.gt.f32.partialorder %v821, 0.0
        %vm824 = vcmp.gt.f32.partialorder %v822, 0.0
        %v825 = vsel %vm823, 1, 0
        %v826 = vsel %vm824, 1, 0
        %vm827 = vcmp.eq.s32.totalorder %v825, 1
        %vm828 = vcmp.eq.s32.totalorder %v826, 1
        %v829 = vsel %vm827, %v813, -1e+30
        %v830 = vsel %vm828, %v814, -1e+30
        %v831 = vsel %vm827, %v815, -1e+30
        %v832 = vsel %vm828, %v816, -1e+30
        %v833 = vsel %vm827, %v817, -1e+30
        %v834 = vsel %vm828, %v818, -1e+30
        %v835 = vsel %vm827, %v819, -1e+30
        %v836 = vsel %vm828, %v820, -1e+30
        %vm837 = vcmask 130048
        %v838 = vsel %vm837, %v829, -inf
        %839 = vmax.xlane.f32.xlu0 %v838
        %v840 = vpop.xlane.xlu0 %839
        %v841 = vsel %vm837, %v830, -inf
        %842 = vmax.xlane.f32.xlu0 %v841
        %v843 = vpop.xlane.xlu0 %842
        %v844 = vsel %vm837, %v831, -inf
        %845 = vmax.xlane.f32.xlu0 %v844
        %v846 = vpop.xlane.xlu0 %845
        %v847 = vsel %vm837, %v832, -inf
        %848 = vmax.xlane.f32.xlu0 %v847
        %v849 = vpop.xlane.xlu0 %848
        %v850 = vsel %vm837, %v833, -inf
        %851 = vmax.xlane.f32.xlu0 %v850
        %v852 = vpop.xlane.xlu0 %851
        %v853 = vsel %vm837, %v834, -inf
        %854 = vmax.xlane.f32.xlu0 %v853
        %v855 = vpop.xlane.xlu0 %854
        %v856 = vsel %vm837, %v835, -inf
        %857 = vmax.xlane.f32.xlu0 %v856
        %v858 = vpop.xlane.xlu0 %857
        %v859 = vsel %vm837, %v836, -inf
        %860 = vmax.xlane.f32.xlu0 %v859
        %v861 = vpop.xlane.xlu0 %860
        %v862 = vsub.f32 %v829, %v840
        %v863 = vsub.f32 %v830, %v843
        %v864 = vsub.f32 %v831, %v846
        %v865 = vsub.f32 %v832, %v849
        %v866 = vsub.f32 %v833, %v852
        %v867 = vsub.f32 %v834, %v855
        %v868 = vsub.f32 %v835, %v858
        %v869 = vsub.f32 %v836, %v861
        %v870 = vmul.f32 %v862, 1.442695
        %v871 = vpow.pop %v870
        %v872 = vmul.f32 %v863, 1.442695
        %v873 = vpow.pop %v872
        %v874 = vmul.f32 %v864, 1.442695
        %v875 = vpow.pop %v874
        %v876 = vmul.f32 %v865, 1.442695
        %v877 = vpow.pop %v876
        %v878 = vmul.f32 %v866, 1.442695
        %v879 = vpow.pop %v878
        %v880 = vmul.f32 %v867, 1.442695
        %v881 = vpow.pop %v880
        %v882 = vmul.f32 %v868, 1.442695
        %v883 = vpow.pop %v882
        %v884 = vmul.f32 %v869, 1.442695
        %v885 = vpow.pop %v884
        %v886 = vmul.f32 %v871, %v821
        %v887 = vmul.f32 %v873, %v822
        %v888 = vmul.f32 %v875, %v821
        %v889 = vmul.f32 %v877, %v822
        %v890 = vmul.f32 %v879, %v821
        %v891 = vmul.f32 %v881, %v822
        %v892 = vmul.f32 %v883, %v821
        %v893 = vmul.f32 %v885, %v822
        %v894 = vsel %vm837, %v886, 0.0
        %895 = vadd.xlane.f32.xlu0 %v894
        %v896 = vpop.xlane.xlu0 %895
        %v897 = vsel %vm837, %v887, 0.0
        %898 = vadd.xlane.f32.xlu0 %v897
        %v899 = vpop.xlane.xlu0 %898
        %v900 = vsel %vm837, %v888, 0.0
        %901 = vadd.xlane.f32.xlu0 %v900
        %v902 = vpop.xlane.xlu0 %901
        %v903 = vsel %vm837, %v889, 0.0
        %904 = vadd.xlane.f32.xlu0 %v903
        %v905 = vpop.xlane.xlu0 %904
        %v906 = vsel %vm837, %v890, 0.0
        %907 = vadd.xlane.f32.xlu0 %v906
        %v908 = vpop.xlane.xlu0 %907
        %v909 = vsel %vm837, %v891, 0.0
        %910 = vadd.xlane.f32.xlu0 %v909
        %v911 = vpop.xlane.xlu0 %910
        %v912 = vsel %vm837, %v892, 0.0
        %913 = vadd.xlane.f32.xlu0 %v912
        %v914 = vpop.xlane.xlu0 %913
        %v915 = vsel %vm837, %v893, 0.0
        %916 = vadd.xlane.f32.xlu0 %v915
        %v917 = vpop.xlane.xlu0 %916
        %vm918 = vcmp.gt.f32.partialorder %v896, 0.0
        %vm919 = vcmp.gt.f32.partialorder %v899, 0.0
        %vm920 = vcmp.gt.f32.partialorder %v902, 0.0
        %vm921 = vcmp.gt.f32.partialorder %v905, 0.0
        %vm922 = vcmp.gt.f32.partialorder %v908, 0.0
        %vm923 = vcmp.gt.f32.partialorder %v911, 0.0
        %vm924 = vcmp.gt.f32.partialorder %v914, 0.0
        %vm925 = vcmp.gt.f32.partialorder %v917, 0.0
        %v926 = vsel %vm918, %v896, 1.0
        %v927 = vsel %vm919, %v899, 1.0
        %v928 = vsel %vm920, %v902, 1.0
        %v929 = vsel %vm921, %v905, 1.0
        %v930 = vsel %vm922, %v908, 1.0
        %v931 = vsel %vm923, %v911, 1.0
        %v932 = vsel %vm924, %v914, 1.0
        %v933 = vsel %vm925, %v917, 1.0
        %v934 = vrcp.pop %v926
        %v935 = vrcp.pop %v927
        %v936 = vrcp.pop %v928
        %v937 = vrcp.pop %v929
        %v938 = vrcp.pop %v930
        %v939 = vrcp.pop %v931
        %v940 = vrcp.pop %v932
        %v941 = vrcp.pop %v933
        %v942 = vmul.f32 %v886, %v934
        %v943 = vmul.f32 %v887, %v935
        %v944 = vmul.f32 %v888, %v936
        %v945 = vmul.f32 %v889, %v937
        %v946 = vmul.f32 %v890, %v938
        %v947 = vmul.f32 %v891, %v939
        %v948 = vmul.f32 %v892, %v940
        %v949 = vmul.f32 %v893, %v941
        %v950 = vpack.c.bf16 %v943, %v942
        %v951 = vpack.c.bf16 %v945, %v944
        %v952 = vpack.c.bf16 %v947, %v946
        %v953 = vpack.c.bf16 %v949, %v948
        %v954 = vpack.c.bf16 %v693, %v690
        %v956 = vsel %vm837, %v950, 0
        %v959 = vsel %vm837, %v951, 0
        %v962 = vsel %vm837, %v952, 0
        %v965 = vsel %vm837, %v953, 0
        %967 = vmatprep.subr.bf16.mxu0 0
        %968 = vmatpush1.bf16.msra.mxu0 0
        %969 = vmatprep.subr.bf16.mxu0 0
        %970 = vmatpush1.bf16.msra.mxu0 0
        %971 = vmatprep.subr.bf16.mxu0 0
        %972 = vmatpush1.bf16.msra.mxu0 0
        %973 = vmatprep.subr.bf16.mxu0 0
        %974 = vmatpush1.bf16.msra.mxu0 0
        %975 = vmatprep.subr.bf16.mxu0 0
        %976 = vmatpush1.bf16.msra.mxu0 0
        %977 = vmatprep.subr.bf16.mxu0 0
        %978 = vmatpush1.bf16.msra.mxu0 0
        %979 = vmatprep.subr.bf16.mxu0 0
        %980 = vmatpush1.bf16.msra.mxu0 0
        %981 = vmatprep.subr.bf16.mxu0 0
        %982 = vmatpush1.bf16.msra.mxu0 %v954
        %983 = vmatprep.subr.bf16.mxu0 0
        %984 = vmatpush2.bf16.msra.mxu0 0
        %985 = vmatprep.subr.bf16.mxu0 0
        %986 = vmatpush2.bf16.msra.mxu0 0
        %987 = vmatprep.subr.bf16.mxu0 0
        %988 = vmatpush2.bf16.msra.mxu0 0
        %989 = vmatprep.subr.bf16.mxu0 0
        %990 = vmatpush2.bf16.msra.mxu0 0
        %991 = vmatprep.subr.bf16.mxu0 0
        %992 = vmatpush2.bf16.msra.mxu0 0
        %993 = vmatprep.subr.bf16.mxu0 0
        %994 = vmatpush2.bf16.msra.mxu0 0
        %995 = vmatprep.subr.bf16.mxu0 0
        %996 = vmatpush2.bf16.msra.mxu0 0
        %997 = vmatprep.subr.bf16.mxu0 0
        %998 = vmatpush2.bf16.msra.mxu0 0
        %999 = vmatprep.mubr.bf16.mxu0 0
        %1000 = vmatmul.mubr.bf16.gmra.mxu0 %v956
        %v1001 = vpop.f32.mrf.mxu0
        %v1002 = vadd.f32 0.0, %v1001
        %v1003 = vpop.f32.mrf.mxu0
        %v1004 = vpop.f32.mrf.mxu0
        %v1005 = vadd.f32 0.0, %v1004
        %v1006 = vpop.f32.mrf.mxu0
        %1007 = vmatprep.mubr.bf16.mxu0 0
        %1008 = vmatmul.mubr.bf16.gmra.mxu0 %v959
        %v1009 = vpop.f32.mrf.mxu0
        %v1010 = vadd.f32 0.0, %v1009
        %v1011 = vpop.f32.mrf.mxu0
        %v1012 = vpop.f32.mrf.mxu0
        %v1013 = vadd.f32 0.0, %v1012
        %v1014 = vpop.f32.mrf.mxu0
        %1015 = vmatprep.mubr.bf16.mxu0 0
        %1016 = vmatmul.mubr.bf16.gmra.mxu0 %v962
        %v1017 = vpop.f32.mrf.mxu0
        %v1018 = vadd.f32 0.0, %v1017
        %v1019 = vpop.f32.mrf.mxu0
        %v1020 = vpop.f32.mrf.mxu0
        %v1021 = vadd.f32 0.0, %v1020
        %v1022 = vpop.f32.mrf.mxu0
        %1023 = vmatprep.mubr.bf16.mxu0 0
        %1024 = vmatmul.mubr.bf16.gmra.mxu0 %v965
        %v1025 = vpop.f32.mrf.mxu0
        %v1026 = vadd.f32 0.0, %v1025
        %v1027 = vpop.f32.mrf.mxu0
        %v1028 = vpop.f32.mrf.mxu0
        %v1029 = vadd.f32 0.0, %v1028
        %v1030 = vpop.f32.mrf.mxu0
        %1031 = vdwg.mxu0
        %v1032 = vunpack.c.l.bf16 %v487
        %v1033 = vunpack.c.l.bf16 %v488
        %v1034 = vunpack.c.l.bf16 %v489
        %v1035 = vunpack.c.l.bf16 %v490
        %v1036 = vunpack.c.l.bf16 %v491
        %v1037 = vunpack.c.l.bf16 %v492
        %v1038 = vunpack.c.l.bf16 %v493
        %v1039 = vunpack.c.l.bf16 %v494
        %v1040 = vmul.f32 %v1002, %v1032
        %v1041 = vmul.f32 %v1005, %v1033
        %v1042 = vmul.f32 %v1010, %v1034
        %v1043 = vmul.f32 %v1013, %v1035
        %v1044 = vmul.f32 %v1018, %v1036
        %v1045 = vmul.f32 %v1021, %v1037
        %v1046 = vmul.f32 %v1026, %v1038
        %v1047 = vmul.f32 %v1029, %v1039
        %v1048 = vadd.f32 %v1040, %v1042
        %v1049 = vadd.f32 %v1041, %v1043
        %v1050 = vadd.f32 %v1048, %v1044
        %v1051 = vadd.f32 %v1049, %v1045
        %v1052 = vadd.f32 %v1050, %v1046
        %v1053 = vadd.f32 %v1051, %v1047
        %v1054 = vpack.c.bf16 %v1053, %v1052
        %v1055 = vld [vmem:[%s9] sm:$0xf]
        %v1056 = vld [vmem:[%s9 + $0x4] sm:$0xf]
        %v1057 = vld [vmem:[%s9 + $0x8] sm:$0xf]
        %v1058 = vld [vmem:[%s9 + $0xc] sm:$0xf]
        %v1059 = vld [vmem:[%s10] sm:$0x1]
        %v1061 = vlaneseq
        %v1062 = vshrl.u32 %v1061, 7
        %v1063 = vsub.s32 0, %v1062
        %v1064 = vrot.slane %v1059, %v1063
        %v1070 = vunpack.c.l.b16 %v1055
        %v1071 = vunpack.c.l.b16 %v1056
        %v1072 = vunpack.c.l.b16 %v1057
        %v1073 = vunpack.c.l.b16 %v1058
        %v1074 = vpack.c.b16 %v1071, %v1070
        %v1075 = vpack.c.b16 %v1073, %v1072
        %v1079 = vsel %vm523, %v1054, 0
        %1081 = vmatprep.subr.bf16.mxu0 0
        %1082 = vmatpush1.bf16.msra.mxu0 0
        %1083 = vmatprep.subr.bf16.mxu0 0
        %1084 = vmatpush1.bf16.msra.mxu0 0
        %1085 = vmatprep.subr.bf16.mxu0 0
        %1086 = vmatpush1.bf16.msra.mxu0 0
        %1087 = vmatprep.subr.bf16.mxu0 0
        %1088 = vmatpush1.bf16.msra.mxu0 0
        %1089 = vmatprep.subr.bf16.mxu0 0
        %1090 = vmatpush1.bf16.msra.mxu0 0
        %1091 = vmatprep.subr.bf16.mxu0 0
        %1092 = vmatpush1.bf16.msra.mxu0 0
        %1093 = vmatprep.subr.bf16.mxu0 0
        %1094 = vmatpush1.bf16.msra.mxu0 %v1075
        %1095 = vmatprep.subr.bf16.mxu0 0
        %1096 = vmatpush1.bf16.msra.mxu0 %v1074
        %1097 = vmatprep.subr.bf16.mxu0 0
        %1098 = vmatpush2.bf16.msra.mxu0 0
        %1099 = vmatprep.subr.bf16.mxu0 0
        %1100 = vmatpush2.bf16.msra.mxu0 0
        %1101 = vmatprep.subr.bf16.mxu0 0
        %1102 = vmatpush2.bf16.msra.mxu0 0
        %1103 = vmatprep.subr.bf16.mxu0 0
        %1104 = vmatpush2.bf16.msra.mxu0 0
        %1105 = vmatprep.subr.bf16.mxu0 0
        %1106 = vmatpush2.bf16.msra.mxu0 0
        %1107 = vmatprep.subr.bf16.mxu0 0
        %1108 = vmatpush2.bf16.msra.mxu0 0
        %1109 = vmatprep.subr.bf16.mxu0 0
        %1110 = vmatpush2.bf16.msra.mxu0 0
        %1111 = vmatprep.subr.bf16.mxu0 0
        %1112 = vmatpush2.bf16.msra.mxu0 0
        %1113 = vmatprep.mubr.bf16.mxu0 0
        %1114 = vmatmul.mubr.bf16.gmra.mxu0 %v1079
        %v1115 = vpop.f32.mrf.mxu0
        %v1116 = vadd.f32 %v1064, %v1115
        %v1117 = vpop.f32.mrf.mxu0
        %v1118 = vpop.f32.mrf.mxu0
        %v1119 = vadd.f32 %v1064, %v1118
        %v1120 = vpop.f32.mrf.mxu0
        %1121 = vdwg.mxu0
        %1122 = vst.msk [vmem:[%s481] sm:$0xff] %vm523, %v1116
        %1123 = vst.msk [vmem:[%s481 + $0x8] sm:$0xff] %vm523, %v1119
        %s1124 = sand.u32 %s281, 1
        %s1125 = scalar_lea.sflag [#allocation4], %s1124
        %s1126 = sand.u32 %s281, 1
        %s1127 = smul.addr %s1126, 16
        %s1128 = scalar_lea.vmem [#allocation11], %s1127
        // Predicated region
        $region85: #{tpu_custom_call.1} parent=63 // pred_check
          %p1129 = pneg %p291
        $region86: #{tpu_custom_call.1} parent=63 // pred_check_branch
          %1131 = sbr.rel (%p1129) target = $region88
        $region87: #{tpu_custom_call.1} parent=63 // pred_region
          %s1133 = ssub.s32 256, 256
          %1134 = vsyncadd %s1125, %s1133
          %s1135 = smul.addr %s32, 2
          %s1136 = smul.addr %s1135, 128
          %s1137 = scalar_lea.hbm %s11, %s1136
          %s1138 = sshll.u32 %s1128, 4
          %s1139 = int_to_ptr.vmem [resolvable:$true] %s1138
          %1144 = dma.vmem_to_hbm [thread:$0]  %s1139, 256, %s1137, %s1125, 128, 128, 8
        $region88: #{tpu_custom_call.1} parent=63 // pred_fallthru
          _
      $region64: #{tpu_custom_call.1} parent=5 // pred_fallthru
        _
      %p1145 = scmp.le.s32.totalorder 2, %s27
      // Predicated region
      $region89: #{tpu_custom_call.1} parent=5 // pred_check
        %p1146 = pneg %p1145
      $region90: #{tpu_custom_call.1} parent=5 // pred_check_branch
        %1148 = sbr.rel (%p1146) target = $region92
      $region91: #{tpu_custom_call.1} parent=5 // pred_region
        %s1149 = ssub.s32 %s27, 2
        // Predicated region
        $region93: #{tpu_custom_call.1} parent=91 // pred_check
          %p1150 = pneg %p297
        $region94: #{tpu_custom_call.1} parent=91 // pred_check_branch
          %1152 = sbr.rel (%p1150) target = $region96
        $region95: #{tpu_custom_call.1} parent=91 // pred_region
          %s1153 = sand.u32 %s282, 1
          %s1154 = scalar_lea.sflag [#allocation4], %s1153
          %s1155 = sand.u32 %s282, 1
          %s1156 = smul.addr %s1155, 16
          %s1157 = scalar_lea.vmem [#allocation11], %s1156
          %1158 = dma.done %s1154, 256
        $region96: #{tpu_custom_call.1} parent=91 // pred_fallthru
          _
      $region92: #{tpu_custom_call.1} parent=5 // pred_fallthru
        _
    $region6: #{tpu_custom_call.1} parent=1 // loop_footer
      %s31 = sadd.s32 1, %s27
    $region7: #{tpu_custom_call.1} parent=1 // loop_footer_branch
      %26 = sbr.rel target = $region3
    $region8: #{tpu_custom_call.1} parent=1 // loop_exit
      _
    %1159 = vsyncpa [#allocation3], 1
    %s1160 = scalar_lea.sflag [#allocation3], 1
    %1161 = vsyncpa %s1160, 1
    %1162 = vsyncpa [#allocation6], 1
    %s1163 = scalar_lea.sflag [#allocation6], 1
    %1164 = vsyncpa %s1163, 1
    %1165 = vsyncpa [#allocation9], 1
    %1166 = vsyncpa [#allocation4], 1
    %s1167 = scalar_lea.sflag [#allocation4], 1
    %1168 = vsyncpa %s1167, 1

</llo_original>
